<compile_context>
chip_gen: v5e
topology: v5e:2x2
jax: 0.10.0
libtpu: 0.0.40
codegen_flags: <defaults>
</compile_context>

<pallas_src>
import functools

import jax
import jax.numpy as jnp
from jax.experimental import pallas as pl
from jax.experimental.pallas import tpu as pltpu

_LANE = 128
_SUBLANE = 8
# 48 MiB scoped VMEM: > 32 MiB default (helps v5e/v6e), < 64 MiB physical (v7x-safe).
_VMEM_LIMIT = 48 * 1024 * 1024
# Tile sizing budgets against 40 MiB to leave headroom for compiler scratch.
_TILE_VMEM_BUDGET = 40 * 1024 * 1024


def _round_up(x, m):
    return (x + m - 1) // m * m


def _choose_tile_b(B, D, L, *, emit_z, vmem_budget=_TILE_VMEM_BUDGET):
    """Largest 128-multiple batch tile that fits the VMEM budget (cap 1024 rows).

    Keeps the grid length >= 2 when the batch allows it so v7x's two TensorCores
    both get work, and returns the padded batch size (multiple of the tile).
    """
    b_min = _round_up(B, _LANE)
    # Double-buffered f32 x tile (+ z tile when emitted), bytes per batch row.
    per_row = 2 * D * 4 + (2 * L * 4 if emit_z else 0)
    # Double-buffered replicated bf16 weights + f32 biases + partial-SSE block.
    fixed = 2 * (D * L * 2 + L * D * 2 + (L + D) * 4) + 2 * _SUBLANE * D * 4
    avail = max(vmem_budget - fixed, per_row * _LANE)
    tile = min((avail // per_row) // _LANE * _LANE, 1024)
    tile = max(min(tile, b_min), _LANE)
    # Prefer >= 2 grid steps (megacore sharding on v7x, pipelining everywhere).
    if b_min >= 2 * _LANE and b_min // tile < 2:
        tile = max((b_min // 2) // _LANE * _LANE, _LANE)
    b_pad = _round_up(B, tile)
    return int(tile), int(b_pad)


def _pad_batch(x, b_pad):
    B = x.shape[0]
    return x if b_pad == B else jnp.pad(x, ((0, b_pad - B), (0, 0)))


# -----------------------------------------------------------------------------
# Pallas kernels (hot path)
# -----------------------------------------------------------------------------
def _encoder_kernel(x_ref, w_enc_ref, b_enc_ref, z_ref):
    # z = x @ W_enc + b_enc : (TILE_B, D) @ (D, L) -> (TILE_B, L), f32 accumulate.
    x_bf = x_ref[...].astype(jnp.bfloat16)
    z = jnp.dot(x_bf, w_enc_ref[...], preferred_element_type=jnp.float32)
    z_ref[...] = z + b_enc_ref[...]


def _fused_fwd_kernel(x_ref, w_enc_ref, b_enc_ref, w_dec_ref, b_dec_ref,
                      *out_refs, n_valid, emit_z):
    """Fused encoder + decoder + per-tile partial MSE for one batch tile.

    No cross-step carry: each grid step writes its own lane-dense (8, D)
    partial-SSE block, so the batch grid axis is safely "parallel".
    """
    if emit_z:
        z_ref, sse_ref = out_refs
    else:
        (sse_ref,) = out_refs

    tile_b = x_ref.shape[0]
    i = pl.program_id(0)

    x_f32 = x_ref[...]

    # Encoder (MXU, bf16 operands, f32 accumulation).
    z = (jnp.dot(x_f32.astype(jnp.bfloat16), w_enc_ref[...],
                 preferred_element_type=jnp.float32) + b_enc_ref[...])
    if emit_z:
        z_ref[...] = z  # lane-dense (L % 128 == 0), one unmasked store per tile

    # Decoder + squared error for this tile.
    x_hat = (jnp.dot(z.astype(jnp.bfloat16), w_dec_ref[...],
                     preferred_element_type=jnp.float32) + b_dec_ref[...])
    diff = x_hat - x_f32

    # Mask padded rows (global row >= n_valid) out of the loss.
    row = jax.lax.broadcasted_iota(jnp.int32, (tile_b, 1), 0) + i * tile_b
    diff = jnp.where(row < n_valid, diff, 0.0)
    sq = diff * diff

    # Reduce the tile to a sublane-aligned (8, D) partial (pure VPU adds,
    # no masked partial-sublane stores, no cross-step accumulator).
    sse_ref[...] = jnp.sum(sq.reshape(tile_b // _SUBLANE, _SUBLANE, sq.shape[-1]),
                           axis=0)


# -----------------------------------------------------------------------------
# pallas_call wrappers
# -----------------------------------------------------------------------------
def pallas_encode(x, w_enc, b_enc):
    """Inference-only path: z = x @ W_enc + b_enc, batch-tiled, parallel grid."""
    B, D = x.shape
    L = w_enc.shape[1]
    tile_b, b_pad = _choose_tile_b(B, D, L, emit_z=True)
    grid_n = b_pad // tile_b
    x_p = _pad_batch(x, b_pad)

    cost = pl.CostEstimate(
        flops=int(2 * B * D * L),
        transcendentals=0,
        bytes_accessed=int(x_p.size * 4 + D * L * 2 + L * 4 + b_pad * L * 4),
    )
    z = pl.pallas_call(
        _encoder_kernel,
        out_shape=jax.ShapeDtypeStruct((b_pad, L), jnp.float32),
        grid_spec=pltpu.PrefetchScalarGridSpec(
            num_scalar_prefetch=0,
            grid=(grid_n,),
            in_specs=[
                pl.BlockSpec((tile_b, D), lambda i: (i, 0)),   # x tile (pipelined)
                # Replicated params (constant index_map -> fetched once, reused).
                # TODO(synk): single-buffer these (pipeline_mode=pl.Buffered(1))
                # once reliably supported; the extra buffer is already in the
                # VMEM budget and is negligible at these D/L.
                pl.BlockSpec((D, L), lambda i: (0, 0)),        # W_enc
                pl.BlockSpec((1, L), lambda i: (0, 0)),        # b_enc
            ],
            out_specs=pl.BlockSpec((tile_b, L), lambda i: (i, 0)),
        ),
        compiler_params=pltpu.CompilerParams(
            dimension_semantics=("parallel",),
            vmem_limit_bytes=_VMEM_LIMIT,
        ),
        cost_estimate=cost,
    )(x_p, w_enc, b_enc)
    return z[:B] if b_pad != B else z


def _fused_call(x, w_enc, b_enc, w_dec, b_dec, *, emit_z):
    """Fused encoder + decoder + MSE.  Returns (z_or_None, scalar_loss)."""
    B, D = x.shape
    L = w_enc.shape[1]
    tile_b, b_pad = _choose_tile_b(B, D, L, emit_z=emit_z)
    grid_n = b_pad // tile_b
    x_p = _pad_batch(x, b_pad)

    in_specs = [
        pl.BlockSpec((tile_b, D), lambda i: (i, 0)),   # x tile (pipelined)
        pl.BlockSpec((D, L), lambda i: (0, 0)),        # W_enc (replicated)
        pl.BlockSpec((1, L), lambda i: (0, 0)),        # b_enc
        pl.BlockSpec((L, D), lambda i: (0, 0)),        # W_dec
        pl.BlockSpec((1, D), lambda i: (0, 0)),        # b_dec
    ]
    out_shapes = []
    out_specs = []
    if emit_z:
        out_shapes.append(jax.ShapeDtypeStruct((b_pad, L), jnp.float32))
        out_specs.append(pl.BlockSpec((tile_b, L), lambda i: (i, 0)))
    # Per-tile partial SSE, lane-dense (8, D) block per grid step.
    out_shapes.append(jax.ShapeDtypeStruct((grid_n * _SUBLANE, D), jnp.float32))
    out_specs.append(pl.BlockSpec((_SUBLANE, D), lambda i: (i, 0)))

    z_bytes = b_pad * L * 4 if emit_z else 0
    cost = pl.CostEstimate(
        flops=int(4 * B * D * L + 3 * B * D),
        transcendentals=0,
        bytes_accessed=int(x_p.size * 4 + 2 * D * L * 2 + (L + D) * 4
                           + z_bytes + grid_n * _SUBLANE * D * 4),
    )

    kernel = functools.partial(_fused_fwd_kernel, n_valid=B, emit_z=emit_z)
    outs = pl.pallas_call(
        kernel,
        out_shape=tuple(out_shapes),
        grid_spec=pltpu.PrefetchScalarGridSpec(
            num_scalar_prefetch=0,
            grid=(grid_n,),
            in_specs=in_specs,
            out_specs=tuple(out_specs),
        ),
        compiler_params=pltpu.CompilerParams(
            # No carried accumulator -> batch axis is embarrassingly parallel
            # (shards across both TensorCores on v7x, harmless on v5e/v6e).
            dimension_semantics=("parallel",),
            vmem_limit_bytes=_VMEM_LIMIT,
        ),
        cost_estimate=cost,
    )(x_p, w_enc, b_enc, w_dec, b_dec)

    if emit_z:
        z_p, partials = outs
        z = z_p[:B] if b_pad != B else z_p
    else:
        (partials,) = outs
        z = None
    # Final reduce of the tiny (grid_n*8, D) partial buffer + scale by 1/(B*D).
    loss = jnp.sum(partials) * (1.0 / float(B * D))
    return z, loss


def pallas_forward_with_loss(x, w_enc, b_enc, w_dec, b_dec):
    """Fused path: (z, scalar MSE loss) from a single kernel launch."""
    return _fused_call(x, w_enc, b_enc, w_dec, b_dec, emit_z=True)


def pallas_loss_only(x, w_enc, b_enc, w_dec, b_dec):
    """Loss-only variant: z stays in VMEM, never written to HBM."""
    _, loss = _fused_call(x, w_enc, b_enc, w_dec, b_dec, emit_z=False)
    return loss


# -----------------------------------------------------------------------------
# BaseModuleClass / _generic_forward semantics
# -----------------------------------------------------------------------------
def _get_dict_if_none(param):
    return {} if not isinstance(param, dict) else param


def _generic_forward(module, tensors, inference_kwargs, loss_kwargs,
                     get_inference_input_kwargs, compute_loss):
    """Core of the forward call (mirrors the PyTorch _generic_forward)."""
    inference_kwargs = _get_dict_if_none(inference_kwargs)
    loss_kwargs = _get_dict_if_none(loss_kwargs)
    get_inference_input_kwargs = _get_dict_if_none(get_inference_input_kwargs)
    inference_inputs = module._get_inference_input(
        tensors, **get_inference_input_kwargs)
    inference_outputs = module.inference(**inference_inputs, **inference_kwargs)
    if compute_loss:
        losses = module.loss(tensors, inference_outputs, **loss_kwargs)
        return {"loss": losses, "inference_outputs": inference_outputs}
    return inference_outputs


class FocusLinearModule:
    """Minimal concrete BaseModuleClass with Pallas-backed inference/loss."""

    def __init__(self, n_input, n_latent, key):
        k1, k2, k3, k4 = jax.random.split(key, 4)
        scale_e = 1.0 / jnp.sqrt(jnp.float32(n_input))
        scale_d = 1.0 / jnp.sqrt(jnp.float32(n_latent))
        # Weights kept in bf16 (MXU-native, halves HBM/VMEM bytes); biases f32.
        self.w_enc = (jax.random.normal(k1, (n_input, n_latent), jnp.float32)
                      * scale_e).astype(jnp.bfloat16)
        self.b_enc = jax.random.normal(k2, (1, n_latent), jnp.float32) * 0.01
        self.w_dec = (jax.random.normal(k3, (n_latent, n_input), jnp.float32)
                      * scale_d).astype(jnp.bfloat16)
        self.b_dec = jax.random.normal(k4, (1, n_input), jnp.float32) * 0.01

    # ---- abstract methods implemented concretely -----------------------
    def _get_inference_input(self, tensors, **kwargs):
        return {"x": tensors["x"]}

    def inference(self, x, **kwargs):
        return {"z": pallas_encode(x, self.w_enc, self.b_enc)}

    def loss(self, tensors, inference_outputs, **kwargs):
        # Loss-only fused kernel: z is recomputed on-chip in VMEM instead of
        # being re-read from (or written to) HBM.
        return pallas_loss_only(tensors["x"], self.w_enc, self.b_enc,
                                self.w_dec, self.b_dec)

    # ---- BaseModuleClass.forward ---------------------------------------
    def forward(self, tensors, get_inference_input_kwargs=None,
                inference_kwargs=None, loss_kwargs=None, compute_loss=True):
        get_inference_input_kwargs = _get_dict_if_none(get_inference_input_kwargs)
        inference_kwargs = _get_dict_if_none(inference_kwargs)
        loss_kwargs = _get_dict_if_none(loss_kwargs)
        if compute_loss:
            # Fused fast path: one pallas_call produces both inference outputs
            # and the loss. Return contract identical to _generic_forward(True).
            inference_inputs = self._get_inference_input(
                tensors, **get_inference_input_kwargs)
            z, loss = pallas_forward_with_loss(
                inference_inputs["x"], self.w_enc, self.b_enc,
                self.w_dec, self.b_dec)
            return {"loss": loss, "inference_outputs": {"z": z}}
        return _generic_forward(self, tensors, inference_kwargs, loss_kwargs,
                                get_inference_input_kwargs, compute_loss)

    # TODO(synk): `device` property, `on_load` hook and @auto_move_data are
    # framework plumbing with no Pallas equivalent; intentionally omitted.


if __name__ == "__main__":
    key = jax.random.PRNGKey(0)
    k_param, k_data = jax.random.split(key)

    # Lane-dense feature dims (multiples of 128); batch intentionally NOT a
    # multiple of 128 to exercise the pad + in-kernel mask path.
    batch, n_input, n_latent = 200, 256, 128
    module = FocusLinearModule(n_input, n_latent, k_param)

    x = jax.random.normal(k_data, (batch, n_input), jnp.float32)
    tensors = {"x": x}

    # compute_loss=True path: {'loss': scalar, 'inference_outputs': {'z': ...}}
    out = module.forward(tensors, compute_loss=True)
    jax.block_until_ready(out["loss"])
    jax.block_until_ready(out["inference_outputs"]["z"])

    # compute_loss=False path: just the inference outputs dict
    inf_only = module.forward(tensors, compute_loss=False)
    jax.block_until_ready(inf_only["z"])

    # Standalone loss() call (loss-only kernel, no z writeback).
    loss_only = module.loss(tensors, inf_only)
    jax.block_until_ready(loss_only)

    # Reference computed with the same bf16-matmul / f32-accumulate recipe.
    z_ref = (jnp.dot(x.astype(jnp.bfloat16), module.w_enc,
                     preferred_element_type=jnp.float32) + module.b_enc)
    x_hat_ref = (jnp.dot(z_ref.astype(jnp.bfloat16), module.w_dec,
                         preferred_element_type=jnp.float32) + module.b_dec)
    loss_ref = jnp.mean((x_hat_ref - x) ** 2)

    assert out["inference_outputs"]["z"].shape == (batch, n_latent)
    assert out["loss"].shape == ()
    assert jnp.isfinite(out["loss"])
    assert jnp.allclose(out["inference_outputs"]["z"], z_ref, rtol=1e-2, atol=1e-2)
    assert jnp.allclose(inf_only["z"], z_ref, rtol=1e-2, atol=1e-2)
    assert jnp.allclose(out["loss"], loss_ref, rtol=1e-2, atol=1e-3)
    assert jnp.allclose(loss_only, loss_ref, rtol=1e-2, atol=1e-3)

    print("KERNEL_OK")
</pallas_src>

<mosaic_0001>
module attributes {stable_mosaic.version = 11 : i64} {
  func.func @_fused_fwd_kernel(%arg0: i32, %arg1: memref<128x256xf32, #tpu.memory_space<vmem>>, %arg2: memref<256x128xbf16, #tpu.memory_space<vmem>>, %arg3: memref<1x128xf32, #tpu.memory_space<vmem>>, %arg4: memref<128x256xbf16, #tpu.memory_space<vmem>>, %arg5: memref<1x256xf32, #tpu.memory_space<vmem>>, %arg6: memref<128x128xf32, #tpu.memory_space<vmem>>, %arg7: memref<8x256xf32, #tpu.memory_space<vmem>>) attributes {dimension_semantics = [#tpu.dimension_semantics<parallel>], iteration_bounds = array<i64: 2>, scalar_prefetch = 0 : i64, scratch_operands = 0 : i64, tpu.core_type = #tpu.core_type<tc>, window_params = [{transform_indices = @transform_0, window_bounds = array<i64: 128, 256>}, {pipeline_mode = #tpu.pipeline_mode<synchronous>, transform_indices = @transform_1, window_bounds = array<i64: 256, 128>}, {pipeline_mode = #tpu.pipeline_mode<synchronous>, transform_indices = @transform_2, window_bounds = array<i64: 1, 128>}, {pipeline_mode = #tpu.pipeline_mode<synchronous>, transform_indices = @transform_3, window_bounds = array<i64: 128, 256>}, {pipeline_mode = #tpu.pipeline_mode<synchronous>, transform_indices = @transform_4, window_bounds = array<i64: 1, 256>}, {transform_indices = @transform_5, window_bounds = array<i64: 128, 128>}, {transform_indices = @transform_6, window_bounds = array<i64: 8, 256>}]} {
    %c0 = arith.constant 0 : index
    %c0_0 = arith.constant 0 : index
    %0 = vector.load %arg1[%c0, %c0_0] : memref<128x256xf32, #tpu.memory_space<vmem>>, vector<128x256xf32>
    %1 = arith.truncf %0 : vector<128x256xf32> to vector<128x256xbf16>
    %c0_1 = arith.constant 0 : index
    %c0_2 = arith.constant 0 : index
    %2 = vector.load %arg2[%c0_1, %c0_2] : memref<256x128xbf16, #tpu.memory_space<vmem>>, vector<256x128xbf16>
    %cst = arith.constant dense<0.000000e+00> : vector<128x128xf32>
    %3 = tpu.matmul %1, %2, %cst {dimension_numbers = #tpu.dot_dimension_numbers<[1], [0], [0], [1], [0, 0, 1, 1], [], []>} : vector<128x256xbf16>, vector<256x128xbf16>, vector<128x128xf32> -> vector<128x128xf32>
    %c0_3 = arith.constant 0 : index
    %c0_4 = arith.constant 0 : index
    %4 = vector.load %arg3[%c0_3, %c0_4] : memref<1x128xf32, #tpu.memory_space<vmem>>, vector<1x128xf32>
    %5 = vector.broadcast %4 : vector<1x128xf32> to vector<128x128xf32>
    %6 = arith.addf %3, %5 : vector<128x128xf32>
    %c0_5 = arith.constant 0 : index
    %c0_6 = arith.constant 0 : index
    %7 = vector.load %arg6[%c0_5, %c0_6] : memref<128x128xf32, #tpu.memory_space<vmem>>, vector<128x128xf32>
    tpu.vector_store %arg6[%c0_5, %c0_6], %6 {strides = array<i32>} : memref<128x128xf32, #tpu.memory_space<vmem>>, vector<128x128xf32>,
    %8 = arith.truncf %6 : vector<128x128xf32> to vector<128x128xbf16>
    %c0_7 = arith.constant 0 : index
    %c0_8 = arith.constant 0 : index
    %9 = vector.load %arg4[%c0_7, %c0_8] : memref<128x256xbf16, #tpu.memory_space<vmem>>, vector<128x256xbf16>
    %cst_9 = arith.constant dense<0.000000e+00> : vector<128x256xf32>
    %10 = tpu.matmul %8, %9, %cst_9 {dimension_numbers = #tpu.dot_dimension_numbers<[1], [0], [0], [1], [0, 0, 1, 1], [], []>} : vector<128x128xbf16>, vector<128x256xbf16>, vector<128x256xf32> -> vector<128x256xf32>
    %c0_10 = arith.constant 0 : index
    %c0_11 = arith.constant 0 : index
    %11 = vector.load %arg5[%c0_10, %c0_11] : memref<1x256xf32, #tpu.memory_space<vmem>>, vector<1x256xf32>
    %12 = vector.broadcast %11 : vector<1x256xf32> to vector<128x256xf32>
    %13 = arith.addf %10, %12 : vector<128x256xf32>
    %14 = arith.subf %13, %0 : vector<128x256xf32>
    %15 = tpu.iota {dimensions = array<i32: 0>} : vector<128x1xi32>
    %c128_i32 = arith.constant 128 : i32
    %16 = arith.muli %arg0, %c128_i32 : i32
    %17 = vector.broadcast %16 : i32 to vector<128x1xi32>
    %18 = arith.addi %15, %17 : vector<128x1xi32>
    %c200_i32 = arith.constant 200 : i32
    %19 = vector.broadcast %c200_i32 : i32 to vector<128x1xi32>
    %20 = arith.cmpi slt, %18, %19 : vector<128x1xi32>
    %cst_12 = arith.constant 0.000000e+00 : f32
    %21 = vector.shape_cast %20 : vector<128x1xi1> to vector<128x1xi1>
    %22 = vector.broadcast %21 : vector<128x1xi1> to vector<128x256xi1>
    %23 = vector.broadcast %cst_12 : f32 to vector<128x256xf32>
    %24 = arith.select %22, %14, %23 : vector<128x256xi1>, vector<128x256xf32>
    %25 = arith.mulf %24, %24 : vector<128x256xf32>
    %26 = vector.shape_cast %25 : vector<128x256xf32> to vector<16x8x256xf32>
    %cst_13 = arith.constant dense<0.000000e+00> : vector<8x256xf32>
    %27 = vector.multi_reduction <add>, %26, %cst_13 [0] : vector<16x8x256xf32> to vector<8x256xf32>
    %c0_14 = arith.constant 0 : index
    %c0_15 = arith.constant 0 : index
    %28 = vector.load %arg7[%c0_14, %c0_15] : memref<8x256xf32, #tpu.memory_space<vmem>>, vector<8x256xf32>
    tpu.vector_store %arg7[%c0_14, %c0_15], %27 {strides = array<i32>} : memref<8x256xf32, #tpu.memory_space<vmem>>, vector<8x256xf32>,
    return
  }
  func.func @transform_0(%arg0: i32) -> (i32, i32) {
    %c0_i32 = arith.constant 0 : i32
    %c0_i32_0 = arith.constant 0 : i32
    return %arg0, %c0_i32 : i32, i32
  }
  func.func @transform_1(%arg0: i32) -> (i32, i32) {
    %c0_i32 = arith.constant 0 : i32
    %c0_i32_0 = arith.constant 0 : i32
    %c0_i32_1 = arith.constant 0 : i32
    return %c0_i32, %c0_i32_0 : i32, i32
  }
  func.func @transform_2(%arg0: i32) -> (i32, i32) {
    %c0_i32 = arith.constant 0 : i32
    %c0_i32_0 = arith.constant 0 : i32
    %c0_i32_1 = arith.constant 0 : i32
    return %c0_i32, %c0_i32_0 : i32, i32
  }
  func.func @transform_3(%arg0: i32) -> (i32, i32) {
    %c0_i32 = arith.constant 0 : i32
    %c0_i32_0 = arith.constant 0 : i32
    %c0_i32_1 = arith.constant 0 : i32
    return %c0_i32, %c0_i32_0 : i32, i32
  }
  func.func @transform_4(%arg0: i32) -> (i32, i32) {
    %c0_i32 = arith.constant 0 : i32
    %c0_i32_0 = arith.constant 0 : i32
    %c0_i32_1 = arith.constant 0 : i32
    return %c0_i32, %c0_i32_0 : i32, i32
  }
  func.func @transform_5(%arg0: i32) -> (i32, i32) {
    %c0_i32 = arith.constant 0 : i32
    %c0_i32_0 = arith.constant 0 : i32
    return %arg0, %c0_i32 : i32, i32
  }
  func.func @transform_6(%arg0: i32) -> (i32, i32) {
    %c0_i32 = arith.constant 0 : i32
    %c0_i32_0 = arith.constant 0 : i32
    return %arg0, %c0_i32 : i32, i32
  }
}

</mosaic_0001>

<llo_original>
// kernel: tpu_custom_call.1
$region0: #{tpu_custom_call.1}
  #allocation0 [shape = 'u32[]', space=smem, size = 0x4, offset = 0x4, fixed_abs, tag = 'smem constant byte address 0x4 - core index']
  #allocation1 [shape = 'u32[72,128]{1,0:T(1,128)}', space=vmem, size = 0x9000, scoped, tag = 'internal scratch']
  %s0 = inlined_call_operand.hbm [shape: f32[256,256], index: 0, kind: input, shape index: {}]
  %s1 = inlined_call_operand.hbm [shape: bf16[256,128], index: 1, kind: input, shape index: {}]
  %s2 = inlined_call_operand.vmem [shape: f32[1,128], index: 2, kind: input, shape index: {}]
  %s3 = inlined_call_operand.hbm [shape: bf16[128,256], index: 3, kind: input, shape index: {}]
  %s4 = inlined_call_operand.vmem [shape: f32[1,256], index: 4, kind: input, shape index: {}]
  %s5 = inlined_call_operand.hbm [shape: f32[256,128], index: 5, kind: output, shape index: {0}]
  %s6 = inlined_call_operand.hbm [shape: f32[16,256], index: 6, kind: output, shape index: {1}]
  %7 = xla_tuple %s5, %s6
  %s8 = sld [smem:[#allocation0]]
  $region73: #{tpu_custom_call.1} parent=0
    _
  %s10 = ssub.s32 1, %s8
  %s11 = scalar_select 0, %s10, %s8
  $region1: #{tpu_custom_call.1} parent=0
    #allocation2 [shape = 'u8[262144]{0}', space=vmem, size = 0x40000, scoped, tag = 'input window, operand 0']
    #allocation3 [shape = 's32[2]{0}', space=sflag, size = 0x8, scoped, tag = 'scoped memory for tpu_custom_call.1']
    #allocation4 [shape = 's32[2]{0}', space=sflag, size = 0x8, scoped, tag = 'scoped memory for tpu_custom_call.1']
    #allocation5 [shape = 'u8[65536]{0}', space=vmem, size = 0x10000, scoped, tag = 'input window, operand 1, single buffered']
    #allocation6 [shape = 's32[1]{0}', space=sflag, size = 0x4, scoped, tag = 'scoped memory for tpu_custom_call.1']
    #allocation7 [shape = 'u8[65536]{0}', space=vmem, size = 0x10000, scoped, tag = 'input window, operand 3, single buffered']
    #allocation8 [shape = 'u8[131072]{0}', space=vmem, size = 0x20000, scoped, tag = 'output window, operand 0']
    #allocation9 [shape = 'u8[16384]{0}', space=vmem, size = 0x4000, scoped, tag = 'output window, operand 1']
    #allocation10 [shape = 's32[2]{0}', space=sflag, size = 0x8, scoped, tag = 'scoped memory for tpu_custom_call.1']
    %12 = vsyncpa [#allocation3], 0
    %s13 = scalar_lea.sflag [#allocation3], 1
    %14 = vsyncpa %s13, 0
    %15 = vsyncpa [#allocation6], 0
    %16 = vsyncpa [#allocation4], 0
    %s17 = scalar_lea.sflag [#allocation4], 1
    %18 = vsyncpa %s17, 0
    %19 = vsyncpa [#allocation10], 0
    %s20 = scalar_lea.sflag [#allocation10], 1
    %21 = vsyncpa %s20, 0
    loop: start=0, step=1, limit=4
    $region2: #{tpu_custom_call.1} parent=1 // loop_pre_header
      _
    $region3: #{tpu_custom_call.1} parent=1 // loop_header
      %s23 = sphi 0, %s27
      %p24 = scmp.ge.s32.totalorder %s23, 4
      %s33 = sphi 0, %s35
      %s36 = sphi 0, %s33
      %s37 = sphi 0, %s36
      %s53 = sphi 0, %s37
      %s57 = sphi 0, %s57
      %s59 = sphi 0, %s57
      %s60 = sphi 0, %s59
      %s74 = sphi 0, %s60
      %s78 = sphi 0, %s78
      %s80 = sphi 0, %s78
      %s81 = sphi 0, %s80
      %s95 = sphi 0, %s81
      %s99 = sphi 0, %s99
      %s101 = sphi 0, %s99
      %s102 = sphi 0, %s101
      %s116 = sphi 0, %s102
      %s120 = sphi 0, %s120
      %s122 = sphi 0, %s120
      %s123 = sphi 0, %s122
      %s137 = sphi 0, %s123
      %s143 = sphi 0, %s145
      %s146 = sphi 0, %s143
      %s147 = sphi 0, %s146
      %s163 = sphi 0, %s147
      %s169 = sphi 0, %s171
      %s172 = sphi 0, %s169
      %s173 = sphi 0, %s172
      %s189 = sphi 0, %s173
    $region4: #{tpu_custom_call.1} parent=1 // loop_header_branch
      %26 = sbr.rel (%p24) target = $region8
    $region5: #{tpu_custom_call.1} parent=1 // loop_body
      %s28 = ssub.s32 %s23, 1
      %s29 = ssub.s32 %s23, 2
      %s30 = sadd.s32 %s23, 1
      %s31 = ssub.s32 %s23, %s30
      %p32 = scmp.eq.s32.totalorder %s31, 0
      %s34 = sadd.s32 %s33, 1
      %s35 = scalar_select %p32, %s33, %s34
      %p38 = pneg %p32
      %p39 = scmp.eq.s32.totalorder %s23, 1
      %p40 = por %p38, %p39
      %p41 = scmp.ne.s32.totalorder %s33, %s36
      %p42 = scmp.eq.s32.totalorder %s23, 0
      %p43 = por %p41, %p42
      %p44 = scmp.ne.s32.totalorder %s33, %s36
      %p45 = scmp.eq.s32.totalorder %s28, 1
      %p46 = por %p44, %p45
      %p47 = scmp.ne.s32.totalorder %s36, %s37
      %p48 = scmp.eq.s32.totalorder %s28, 0
      %p49 = por %p47, %p48
      %p50 = scmp.ne.s32.totalorder %s36, %s37
      %p51 = scmp.eq.s32.totalorder %s29, 1
      %p52 = por %p50, %p51
      %p54 = scmp.ne.s32.totalorder %s37, %s53
      %p55 = scmp.eq.s32.totalorder %s29, 0
      %p56 = por %p54, %p55
      %s58 = sadd.s32 %s57, 1
      %p61 = scmp.eq.s32.totalorder %s23, 1
      %p62 = scmp.ne.s32.totalorder %s57, %s59
      %p63 = scmp.eq.s32.totalorder %s23, 0
      %p64 = por %p62, %p63
      %p65 = scmp.ne.s32.totalorder %s57, %s59
      %p66 = scmp.eq.s32.totalorder %s28, 1
      %p67 = por %p65, %p66
      %p68 = scmp.ne.s32.totalorder %s59, %s60
      %p69 = scmp.eq.s32.totalorder %s28, 0
      %p70 = por %p68, %p69
      %p71 = scmp.ne.s32.totalorder %s59, %s60
      %p72 = scmp.eq.s32.totalorder %s29, 1
      %p73 = por %p71, %p72
      %p75 = scmp.ne.s32.totalorder %s60, %s74
      %p76 = scmp.eq.s32.totalorder %s29, 0
      %p77 = por %p75, %p76
      %s79 = sadd.s32 %s78, 1
      %p82 = scmp.eq.s32.totalorder %s23, 1
      %p83 = scmp.ne.s32.totalorder %s78, %s80
      %p84 = scmp.eq.s32.totalorder %s23, 0
      %p85 = por %p83, %p84
      %p86 = scmp.ne.s32.totalorder %s78, %s80
      %p87 = scmp.eq.s32.totalorder %s28, 1
      %p88 = por %p86, %p87
      %p89 = scmp.ne.s32.totalorder %s80, %s81
      %p90 = scmp.eq.s32.totalorder %s28, 0
      %p91 = por %p89, %p90
      %p92 = scmp.ne.s32.totalorder %s80, %s81
      %p93 = scmp.eq.s32.totalorder %s29, 1
      %p94 = por %p92, %p93
      %p96 = scmp.ne.s32.totalorder %s81, %s95
      %p97 = scmp.eq.s32.totalorder %s29, 0
      %p98 = por %p96, %p97
      %s100 = sadd.s32 %s99, 1
      %p103 = scmp.eq.s32.totalorder %s23, 1
      %p104 = scmp.ne.s32.totalorder %s99, %s101
      %p105 = scmp.eq.s32.totalorder %s23, 0
      %p106 = por %p104, %p105
      %p107 = scmp.ne.s32.totalorder %s99, %s101
      %p108 = scmp.eq.s32.totalorder %s28, 1
      %p109 = por %p107, %p108
      %p110 = scmp.ne.s32.totalorder %s101, %s102
      %p111 = scmp.eq.s32.totalorder %s28, 0
      %p112 = por %p110, %p111
      %p113 = scmp.ne.s32.totalorder %s101, %s102
      %p114 = scmp.eq.s32.totalorder %s29, 1
      %p115 = por %p113, %p114
      %p117 = scmp.ne.s32.totalorder %s102, %s116
      %p118 = scmp.eq.s32.totalorder %s29, 0
      %p119 = por %p117, %p118
      %s121 = sadd.s32 %s120, 1
      %p124 = scmp.eq.s32.totalorder %s23, 1
      %p125 = scmp.ne.s32.totalorder %s120, %s122
      %p126 = scmp.eq.s32.totalorder %s23, 0
      %p127 = por %p125, %p126
      %p128 = scmp.ne.s32.totalorder %s120, %s122
      %p129 = scmp.eq.s32.totalorder %s28, 1
      %p130 = por %p128, %p129
      %p131 = scmp.ne.s32.totalorder %s122, %s123
      %p132 = scmp.eq.s32.totalorder %s28, 0
      %p133 = por %p131, %p132
      %p134 = scmp.ne.s32.totalorder %s122, %s123
      %p135 = scmp.eq.s32.totalorder %s29, 1
      %p136 = por %p134, %p135
      %p138 = scmp.ne.s32.totalorder %s123, %s137
      %p139 = scmp.eq.s32.totalorder %s29, 0
      %p140 = por %p138, %p139
      %s141 = ssub.s32 %s23, %s30
      %p142 = scmp.eq.s32.totalorder %s141, 0
      %s144 = sadd.s32 %s143, 1
      %s145 = scalar_select %p142, %s143, %s144
      %p148 = pneg %p142
      %p149 = scmp.eq.s32.totalorder %s23, 1
      %p150 = por %p148, %p149
      %p151 = scmp.ne.s32.totalorder %s143, %s146
      %p152 = scmp.eq.s32.totalorder %s23, 0
      %p153 = por %p151, %p152
      %p154 = scmp.ne.s32.totalorder %s143, %s146
      %p155 = scmp.eq.s32.totalorder %s28, 1
      %p156 = por %p154, %p155
      %p157 = scmp.ne.s32.totalorder %s146, %s147
      %p158 = scmp.eq.s32.totalorder %s28, 0
      %p159 = por %p157, %p158
      %p160 = scmp.ne.s32.totalorder %s146, %s147
      %p161 = scmp.eq.s32.totalorder %s29, 1
      %p162 = por %p160, %p161
      %p164 = scmp.ne.s32.totalorder %s147, %s163
      %p165 = scmp.eq.s32.totalorder %s29, 0
      %p166 = por %p164, %p165
      %s167 = ssub.s32 %s23, %s30
      %p168 = scmp.eq.s32.totalorder %s167, 0
      %s170 = sadd.s32 %s169, 1
      %s171 = scalar_select %p168, %s169, %s170
      %p174 = pneg %p168
      %p175 = scmp.eq.s32.totalorder %s23, 1
      %p176 = por %p174, %p175
      %p177 = scmp.ne.s32.totalorder %s169, %s172
      %p178 = scmp.eq.s32.totalorder %s23, 0
      %p179 = por %p177, %p178
      %p180 = scmp.ne.s32.totalorder %s169, %s172
      %p181 = scmp.eq.s32.totalorder %s28, 1
      %p182 = por %p180, %p181
      %p183 = scmp.ne.s32.totalorder %s172, %s173
      %p184 = scmp.eq.s32.totalorder %s28, 0
      %p185 = por %p183, %p184
      %p186 = scmp.ne.s32.totalorder %s172, %s173
      %p187 = scmp.eq.s32.totalorder %s29, 1
      %p188 = por %p186, %p187
      %p190 = scmp.ne.s32.totalorder %s173, %s189
      %p191 = scmp.eq.s32.totalorder %s29, 0
      %p192 = por %p190, %p191
      %p193 = scmp.le.s32.totalorder 1, %s23
      %p194 = scmp.lt.s32.totalorder %s23, 3
      %p195 = pnand %p193, %p194
      %p196 = pneg %p195
      // Predicated region
      $region9: #{tpu_custom_call.1} parent=5 // pred_check
        _
      $region10: #{tpu_custom_call.1} parent=5 // pred_check_branch
        %198 = sbr.rel (%p195) target = $region12
      $region11: #{tpu_custom_call.1} parent=5 // pred_region
        %s199 = ssub.s32 %s23, 1
        // Predicated region
        $region13: #{tpu_custom_call.1} parent=11 // pred_check
          %p200 = pneg %p70
        $region14: #{tpu_custom_call.1} parent=11 // pred_check_branch
          %202 = sbr.rel (%p200) target = $region16
        $region15: #{tpu_custom_call.1} parent=11 // pred_region
          %204 = vsyncadd [#allocation6], 0
          %s205 = sshll.u32 %s1, 4
          %s206 = int_to_ptr.hbm [resolvable:$true] %s205
          %s207 = sshll.u32 [#allocation5], 4
          %s208 = int_to_ptr.vmem [resolvable:$true] %s207
          %213 = dma.hbm_to_vmem [thread:$0]  %s206, 2048, %s208, [#allocation6], 64, 64, 4
        $region16: #{tpu_custom_call.1} parent=11 // pred_fallthru
          _
        // Predicated region
        $region17: #{tpu_custom_call.1} parent=11 // pred_check
          %p214 = pneg %p91
        $region18: #{tpu_custom_call.1} parent=11 // pred_check_branch
          %216 = sbr.rel (%p214) target = $region20
        $region19: #{tpu_custom_call.1} parent=11 // pred_region
          _
        $region20: #{tpu_custom_call.1} parent=11 // pred_fallthru
          _
        // Predicated region
        $region21: #{tpu_custom_call.1} parent=11 // pred_check
          %p217 = pneg %p112
        $region22: #{tpu_custom_call.1} parent=11 // pred_check_branch
          %219 = sbr.rel (%p217) target = $region24
        $region23: #{tpu_custom_call.1} parent=11 // pred_region
          %221 = vsyncadd [#allocation6], 0
          %s222 = sshll.u32 %s3, 4
          %s223 = int_to_ptr.hbm [resolvable:$true] %s222
          %s224 = sshll.u32 [#allocation7], 4
          %s225 = int_to_ptr.vmem [resolvable:$true] %s224
          %230 = dma.hbm_to_vmem [thread:$0]  %s223, 2048, %s225, [#allocation6], 128, 128, 8
        $region24: #{tpu_custom_call.1} parent=11 // pred_fallthru
          _
        // Predicated region
        $region25: #{tpu_custom_call.1} parent=11 // pred_check
          %p231 = pneg %p133
        $region26: #{tpu_custom_call.1} parent=11 // pred_check_branch
          %233 = sbr.rel (%p231) target = $region28
        $region27: #{tpu_custom_call.1} parent=11 // pred_region
          _
        $region28: #{tpu_custom_call.1} parent=11 // pred_fallthru
          _
      $region12: #{tpu_custom_call.1} parent=5 // pred_fallthru
        _
      %p234 = scmp.lt.s32.totalorder %s23, 2
      // Predicated region
      $region29: #{tpu_custom_call.1} parent=5 // pred_check
        %p235 = pneg %p234
      $region30: #{tpu_custom_call.1} parent=5 // pred_check_branch
        %237 = sbr.rel (%p235) target = $region32
      $region31: #{tpu_custom_call.1} parent=5 // pred_region
        // Predicated region
        $region33: #{tpu_custom_call.1} parent=31 // pred_check
          %p238 = pneg %p43
        $region34: #{tpu_custom_call.1} parent=31 // pred_check_branch
          %240 = sbr.rel (%p238) target = $region36
        $region35: #{tpu_custom_call.1} parent=31 // pred_region
          %s241 = sand.u32 %s33, 1
          %s242 = scalar_lea.sflag [#allocation3], %s241
          %s243 = sand.u32 %s33, 1
          %s244 = smul.addr %s243, 256
          %s245 = scalar_lea.vmem [#allocation2], %s244
          %s246 = smul.u32 16, %s23
          %248 = vsyncadd %s242, 0
          %s249 = smul.addr %s246, 2
          %s250 = smul.addr %s249, 8
          %s251 = scalar_lea.hbm %s0, %s250
          %s252 = sshll.u32 %s251, 4
          %s253 = int_to_ptr.hbm [resolvable:$true] %s252
          %s254 = sshll.u32 %s245, 4
          %s255 = int_to_ptr.vmem [resolvable:$true] %s254
          %260 = dma.hbm_to_vmem [thread:$0]  %s253, 4096, %s255, %s242, 256, 256, 16
        $region36: #{tpu_custom_call.1} parent=31 // pred_fallthru
          _
      $region32: #{tpu_custom_call.1} parent=5 // pred_fallthru
        _
      %p261 = scmp.le.s32.totalorder 1, %s23
      %p262 = scmp.lt.s32.totalorder %s23, 3
      %p263 = pnand %p261, %p262
      %p264 = pneg %p263
      // Predicated region
      $region37: #{tpu_custom_call.1} parent=5 // pred_check
        _
      $region38: #{tpu_custom_call.1} parent=5 // pred_check_branch
        %266 = sbr.rel (%p263) target = $region40
      $region39: #{tpu_custom_call.1} parent=5 // pred_region
        %s267 = ssub.s32 %s23, 1
        %s268 = sand.u32 %s36, 1
        %s269 = scalar_lea.sflag [#allocation3], %s268
        %s270 = sand.u32 %s36, 1
        %s271 = smul.addr %s270, 256
        %s272 = scalar_lea.vmem [#allocation2], %s271
        // Predicated region
        $region41: #{tpu_custom_call.1} parent=39 // pred_check
          %p273 = pneg %p49
        $region42: #{tpu_custom_call.1} parent=39 // pred_check_branch
          %275 = sbr.rel (%p273) target = $region44
        $region43: #{tpu_custom_call.1} parent=39 // pred_region
          %277 = dma.done %s269, 4096
        $region44: #{tpu_custom_call.1} parent=39 // pred_fallthru
          _
        // Predicated region
        $region45: #{tpu_custom_call.1} parent=39 // pred_check
          %p278 = pneg %p70
        $region46: #{tpu_custom_call.1} parent=39 // pred_check_branch
          %280 = sbr.rel (%p278) target = $region48
        $region47: #{tpu_custom_call.1} parent=39 // pred_region
          %282 = dma.done [#allocation6], 2048
        $region48: #{tpu_custom_call.1} parent=39 // pred_fallthru
          _
        // Predicated region
        $region49: #{tpu_custom_call.1} parent=39 // pred_check
          %p283 = pneg %p112
        $region50: #{tpu_custom_call.1} parent=39 // pred_check_branch
          %285 = sbr.rel (%p283) target = $region52
        $region51: #{tpu_custom_call.1} parent=39 // pred_region
          %287 = dma.done [#allocation6], 2048
        $region52: #{tpu_custom_call.1} parent=39 // pred_fallthru
          _
        %s288 = sand.u32 %s36, 1
        %s289 = scalar_lea.sflag [#allocation3], %s288
        %s290 = sand.u32 %s36, 1
        %s291 = smul.addr %s290, 256
        %s292 = scalar_lea.vmem [#allocation2], %s291
        %p293 = pneg %p49
        %p294 = pneg %p46
        %p295 = pneg %p70
        %p296 = pneg %p67
        %p297 = pneg %p91
        %p298 = pneg %p88
        %p299 = pneg %p112
        %p300 = pneg %p109
        %p301 = pneg %p133
        %p302 = pneg %p130
        %p303 = pneg %p159
        %p304 = pneg %p156
        %s305 = sand.u32 %s146, 1
        %s306 = scalar_lea.sflag [#allocation4], %s305
        %s307 = sand.u32 %s146, 1
        %s308 = smul.addr %s307, 128
        %s309 = scalar_lea.vmem [#allocation8], %s308
        %p310 = pneg %p185
        %p311 = pneg %p182
        %s312 = sand.u32 %s172, 1
        %s313 = scalar_lea.sflag [#allocation10], %s312
        %s314 = sand.u32 %s172, 1
        %s315 = smul.addr %s314, 16
        %s316 = scalar_lea.vmem [#allocation9], %s315
        %s317 = smul.u32 16, %s28
        %s318 = smul.u32 16, %s28
        %v319 = vld [vmem:[%s272] sm:$0xff]
        %v320 = vld [vmem:[%s272 + $0x8] sm:$0xff]
        %v321 = vld [vmem:[%s272 + $0x10] sm:$0xff]
        %v322 = vld [vmem:[%s272 + $0x18] sm:$0xff]
        %v323 = vld [vmem:[%s272 + $0x20] sm:$0xff]
        %v324 = vld [vmem:[%s272 + $0x28] sm:$0xff]
        %v325 = vld [vmem:[%s272 + $0x30] sm:$0xff]
        %v326 = vld [vmem:[%s272 + $0x38] sm:$0xff]
        %v327 = vld [vmem:[%s272 + $0x40] sm:$0xff]
        %v328 = vld [vmem:[%s272 + $0x48] sm:$0xff]
        %v329 = vld [vmem:[%s272 + $0x50] sm:$0xff]
        %v330 = vld [vmem:[%s272 + $0x58] sm:$0xff]
        %v331 = vld [vmem:[%s272 + $0x60] sm:$0xff]
        %v332 = vld [vmem:[%s272 + $0x68] sm:$0xff]
        %v333 = vld [vmem:[%s272 + $0x70] sm:$0xff]
        %v334 = vld [vmem:[%s272 + $0x78] sm:$0xff]
        %v335 = vld [vmem:[%s272 + $0x80] sm:$0xff]
        %v336 = vld [vmem:[%s272 + $0x88] sm:$0xff]
        %v337 = vld [vmem:[%s272 + $0x90] sm:$0xff]
        %v338 = vld [vmem:[%s272 + $0x98] sm:$0xff]
        %v339 = vld [vmem:[%s272 + $0xa0] sm:$0xff]
        %v340 = vld [vmem:[%s272 + $0xa8] sm:$0xff]
        %v341 = vld [vmem:[%s272 + $0xb0] sm:$0xff]
        %v342 = vld [vmem:[%s272 + $0xb8] sm:$0xff]
        %v343 = vld [vmem:[%s272 + $0xc0] sm:$0xff]
        %v344 = vld [vmem:[%s272 + $0xc8] sm:$0xff]
        %v345 = vld [vmem:[%s272 + $0xd0] sm:$0xff]
        %v346 = vld [vmem:[%s272 + $0xd8] sm:$0xff]
        %v347 = vld [vmem:[%s272 + $0xe0] sm:$0xff]
        %v348 = vld [vmem:[%s272 + $0xe8] sm:$0xff]
        %v349 = vld [vmem:[%s272 + $0xf0] sm:$0xff]
        %v350 = vld [vmem:[%s272 + $0xf8] sm:$0xff]
        %v351 = vpack.c.bf16 %v321, %v319
        %v352 = vpack.c.bf16 %v322, %v320
        %v353 = vpack.c.bf16 %v325, %v323
        %v354 = vpack.c.bf16 %v326, %v324
        %v355 = vpack.c.bf16 %v329, %v327
        %v356 = vpack.c.bf16 %v330, %v328
        %v357 = vpack.c.bf16 %v333, %v331
        %v358 = vpack.c.bf16 %v334, %v332
        %v359 = vpack.c.bf16 %v337, %v335
        %v360 = vpack.c.bf16 %v338, %v336
        %v361 = vpack.c.bf16 %v341, %v339
        %v362 = vpack.c.bf16 %v342, %v340
        %v363 = vpack.c.bf16 %v345, %v343
        %v364 = vpack.c.bf16 %v346, %v344
        %v365 = vpack.c.bf16 %v349, %v347
        %v366 = vpack.c.bf16 %v350, %v348
        %v367 = vld [vmem:[#allocation5] sm:$0xf]
        %v368 = vld [vmem:[#allocation5 + $0x4] sm:$0xf]
        %v369 = vld [vmem:[#allocation5 + $0x8] sm:$0xf]
        %v370 = vld [vmem:[#allocation5 + $0xc] sm:$0xf]
        %v371 = vld [vmem:[#allocation5 + $0x10] sm:$0xf]
        %v372 = vld [vmem:[#allocation5 + $0x14] sm:$0xf]
        %v373 = vld [vmem:[#allocation5 + $0x18] sm:$0xf]
        %v374 = vld [vmem:[#allocation5 + $0x1c] sm:$0xf]
        %v375 = vld [vmem:[#allocation5 + $0x20] sm:$0xf]
        %v376 = vld [vmem:[#allocation5 + $0x24] sm:$0xf]
        %v377 = vld [vmem:[#allocation5 + $0x28] sm:$0xf]
        %v378 = vld [vmem:[#allocation5 + $0x2c] sm:$0xf]
        %v379 = vld [vmem:[#allocation5 + $0x30] sm:$0xf]
        %v380 = vld [vmem:[#allocation5 + $0x34] sm:$0xf]
        %v381 = vld [vmem:[#allocation5 + $0x38] sm:$0xf]
        %v382 = vld [vmem:[#allocation5 + $0x3c] sm:$0xf]
        %v383 = vld [vmem:[#allocation5 + $0x40] sm:$0xf]
        %v384 = vld [vmem:[#allocation5 + $0x44] sm:$0xf]
        %v385 = vld [vmem:[#allocation5 + $0x48] sm:$0xf]
        %v386 = vld [vmem:[#allocation5 + $0x4c] sm:$0xf]
        %v387 = vld [vmem:[#allocation5 + $0x50] sm:$0xf]
        %v388 = vld [vmem:[#allocation5 + $0x54] sm:$0xf]
        %v389 = vld [vmem:[#allocation5 + $0x58] sm:$0xf]
        %v390 = vld [vmem:[#allocation5 + $0x5c] sm:$0xf]
        %v391 = vld [vmem:[#allocation5 + $0x60] sm:$0xf]
        %v392 = vld [vmem:[#allocation5 + $0x64] sm:$0xf]
        %v393 = vld [vmem:[#allocation5 + $0x68] sm:$0xf]
        %v394 = vld [vmem:[#allocation5 + $0x6c] sm:$0xf]
        %v395 = vld [vmem:[#allocation5 + $0x70] sm:$0xf]
        %v396 = vld [vmem:[#allocation5 + $0x74] sm:$0xf]
        %v397 = vld [vmem:[#allocation5 + $0x78] sm:$0xf]
        %v398 = vld [vmem:[#allocation5 + $0x7c] sm:$0xf]
        %v399 = vld [vmem:[%s2] sm:$0x1]
        %v401 = vperm.slane %v399, 0
        %v435 = vunpack.c.l.b16 %v367
        %v436 = vunpack.c.l.b16 %v368
        %v437 = vunpack.c.l.b16 %v369
        %v438 = vunpack.c.l.b16 %v370
        %v439 = vunpack.c.l.b16 %v371
        %v440 = vunpack.c.l.b16 %v372
        %v441 = vunpack.c.l.b16 %v373
        %v442 = vunpack.c.l.b16 %v374
        %v443 = vunpack.c.l.b16 %v375
        %v444 = vunpack.c.l.b16 %v376
        %v445 = vunpack.c.l.b16 %v377
        %v446 = vunpack.c.l.b16 %v378
        %v447 = vunpack.c.l.b16 %v379
        %v448 = vunpack.c.l.b16 %v380
        %v449 = vunpack.c.l.b16 %v381
        %v450 = vunpack.c.l.b16 %v382
        %v451 = vunpack.c.l.b16 %v383
        %v452 = vunpack.c.l.b16 %v384
        %v453 = vunpack.c.l.b16 %v385
        %v454 = vunpack.c.l.b16 %v386
        %v455 = vunpack.c.l.b16 %v387
        %v456 = vunpack.c.l.b16 %v388
        %v457 = vunpack.c.l.b16 %v389
        %v458 = vunpack.c.l.b16 %v390
        %v459 = vunpack.c.l.b16 %v391
        %v460 = vunpack.c.l.b16 %v392
        %v461 = vunpack.c.l.b16 %v393
        %v462 = vunpack.c.l.b16 %v394
        %v463 = vunpack.c.l.b16 %v395
        %v464 = vunpack.c.l.b16 %v396
        %v465 = vunpack.c.l.b16 %v397
        %v466 = vunpack.c.l.b16 %v398
        %v467 = vpack.c.b16 %v436, %v435
        %v468 = vpack.c.b16 %v438, %v437
        %v469 = vpack.c.b16 %v440, %v439
        %v470 = vpack.c.b16 %v442, %v441
        %v471 = vpack.c.b16 %v444, %v443
        %v472 = vpack.c.b16 %v446, %v445
        %v473 = vpack.c.b16 %v448, %v447
        %v474 = vpack.c.b16 %v450, %v449
        %v475 = vpack.c.b16 %v452, %v451
        %v476 = vpack.c.b16 %v454, %v453
        %v477 = vpack.c.b16 %v456, %v455
        %v478 = vpack.c.b16 %v458, %v457
        %v479 = vpack.c.b16 %v460, %v459
        %v480 = vpack.c.b16 %v462, %v461
        %v481 = vpack.c.b16 %v464, %v463
        %v482 = vpack.c.b16 %v466, %v465
        %499 = vmatpush.bf16.msra.mxu0 %v474
        %500 = vmatpush.bf16.msra.mxu0 %v473
        %501 = vmatpush.bf16.msra.mxu0 %v472
        %502 = vmatpush.bf16.msra.mxu0 %v471
        %503 = vmatpush.bf16.msra.mxu0 %v470
        %504 = vmatpush.bf16.msra.mxu0 %v469
        %505 = vmatpush.bf16.msra.mxu0 %v468
        %506 = vmatpush.bf16.msra.mxu0 %v467
        %507 = vmatmul.bf16.gmra.mxu0 %v351
        %v508 = vpop.f32.mrf.mxu0
        %v509 = vadd.f32 %v401, %v508
        %v510 = vpop.f32.mrf.mxu0
        %v511 = vadd.f32 %v401, %v510
        %512 = vmatmul.bf16.gmra.mxu0 %v353
        %v513 = vpop.f32.mrf.mxu0
        %v514 = vadd.f32 %v401, %v513
        %v515 = vpop.f32.mrf.mxu0
        %v516 = vadd.f32 %v401, %v515
        %517 = vmatmul.bf16.gmra.mxu0 %v355
        %v518 = vpop.f32.mrf.mxu0
        %v519 = vadd.f32 %v401, %v518
        %v520 = vpop.f32.mrf.mxu0
        %v521 = vadd.f32 %v401, %v520
        %522 = vmatmul.bf16.gmra.mxu0 %v357
        %v523 = vpop.f32.mrf.mxu0
        %v524 = vadd.f32 %v401, %v523
        %v525 = vpop.f32.mrf.mxu0
        %v526 = vadd.f32 %v401, %v525
        %527 = vmatmul.bf16.gmra.mxu0 %v359
        %v528 = vpop.f32.mrf.mxu0
        %v529 = vadd.f32 %v401, %v528
        %v530 = vpop.f32.mrf.mxu0
        %v531 = vadd.f32 %v401, %v530
        %532 = vmatmul.bf16.gmra.mxu0 %v361
        %v533 = vpop.f32.mrf.mxu0
        %v534 = vadd.f32 %v401, %v533
        %v535 = vpop.f32.mrf.mxu0
        %v536 = vadd.f32 %v401, %v535
        %537 = vmatmul.bf16.gmra.mxu0 %v363
        %v538 = vpop.f32.mrf.mxu0
        %v539 = vadd.f32 %v401, %v538
        %v540 = vpop.f32.mrf.mxu0
        %v541 = vadd.f32 %v401, %v540
        %542 = vmatmul.bf16.gmra.mxu0 %v365
        %v543 = vpop.f32.mrf.mxu0
        %v544 = vadd.f32 %v401, %v543
        %v545 = vpop.f32.mrf.mxu0
        %v546 = vadd.f32 %v401, %v545
        %547 = vdwg.mxu0
        %548 = vmatpush.bf16.msra.mxu0 %v482
        %549 = vmatpush.bf16.msra.mxu0 %v481
        %550 = vmatpush.bf16.msra.mxu0 %v480
        %551 = vmatpush.bf16.msra.mxu0 %v479
        %552 = vmatpush.bf16.msra.mxu0 %v478
        %553 = vmatpush.bf16.msra.mxu0 %v477
        %554 = vmatpush.bf16.msra.mxu0 %v476
        %555 = vmatpush.bf16.msra.mxu0 %v475
        %556 = vmatmul.bf16.gmra.mxu0 %v352
        %v557 = vpop.f32.mrf.mxu0
        %v558 = vadd.f32 %v509, %v557
        %v559 = vpop.f32.mrf.mxu0
        %v560 = vadd.f32 %v511, %v559
        %561 = vmatmul.bf16.gmra.mxu0 %v354
        %v562 = vpop.f32.mrf.mxu0
        %v563 = vadd.f32 %v514, %v562
        %v564 = vpop.f32.mrf.mxu0
        %v565 = vadd.f32 %v516, %v564
        %566 = vmatmul.bf16.gmra.mxu0 %v356
        %v567 = vpop.f32.mrf.mxu0
        %v568 = vadd.f32 %v519, %v567
        %v569 = vpop.f32.mrf.mxu0
        %v570 = vadd.f32 %v521, %v569
        %571 = vmatmul.bf16.gmra.mxu0 %v358
        %v572 = vpop.f32.mrf.mxu0
        %v573 = vadd.f32 %v524, %v572
        %v574 = vpop.f32.mrf.mxu0
        %v575 = vadd.f32 %v526, %v574
        %576 = vmatmul.bf16.gmra.mxu0 %v360
        %v577 = vpop.f32.mrf.mxu0
        %v578 = vadd.f32 %v529, %v577
        %v579 = vpop.f32.mrf.mxu0
        %v580 = vadd.f32 %v531, %v579
        %581 = vmatmul.bf16.gmra.mxu0 %v362
        %v582 = vpop.f32.mrf.mxu0
        %v583 = vadd.f32 %v534, %v582
        %v584 = vpop.f32.mrf.mxu0
        %v585 = vadd.f32 %v536, %v584
        %586 = vmatmul.bf16.gmra.mxu0 %v364
        %v587 = vpop.f32.mrf.mxu0
        %v588 = vadd.f32 %v539, %v587
        %v589 = vpop.f32.mrf.mxu0
        %v590 = vadd.f32 %v541, %v589
        %591 = vmatmul.bf16.gmra.mxu0 %v366
        %v592 = vpop.f32.mrf.mxu0
        %v593 = vadd.f32 %v544, %v592
        %v594 = vpop.f32.mrf.mxu0
        %v595 = vadd.f32 %v546, %v594
        %596 = vdwg.mxu0
        %597 = vst [vmem:[%s309] sm:$0xff] %v558
        %598 = vst [vmem:[%s309 + $0x8] sm:$0xff] %v560
        %599 = vst [vmem:[%s309 + $0x10] sm:$0xff] %v563
        %600 = vst [vmem:[%s309 + $0x18] sm:$0xff] %v565
        %601 = vst [vmem:[%s309 + $0x20] sm:$0xff] %v568
        %602 = vst [vmem:[%s309 + $0x28] sm:$0xff] %v570
        %603 = vst [vmem:[%s309 + $0x30] sm:$0xff] %v573
        %604 = vst [vmem:[%s309 + $0x38] sm:$0xff] %v575
        %605 = vst [vmem:[%s309 + $0x40] sm:$0xff] %v578
        %606 = vst [vmem:[%s309 + $0x48] sm:$0xff] %v580
        %607 = vst [vmem:[%s309 + $0x50] sm:$0xff] %v583
        %608 = vst [vmem:[%s309 + $0x58] sm:$0xff] %v585
        %609 = vst [vmem:[%s309 + $0x60] sm:$0xff] %v588
        %610 = vst [vmem:[%s309 + $0x68] sm:$0xff] %v590
        %611 = vst [vmem:[%s309 + $0x70] sm:$0xff] %v593
        %612 = vst [vmem:[%s309 + $0x78] sm:$0xff] %v595
        %v613 = vpack.c.bf16 %v560, %v558
        %v614 = vpack.c.bf16 %v565, %v563
        %v615 = vpack.c.bf16 %v570, %v568
        %v616 = vpack.c.bf16 %v575, %v573
        %v617 = vpack.c.bf16 %v580, %v578
        %v618 = vpack.c.bf16 %v585, %v583
        %v619 = vpack.c.bf16 %v590, %v588
        %v620 = vpack.c.bf16 %v595, %v593
        %v621 = vld [vmem:[#allocation7] sm:$0xff]
        %v622 = vld [vmem:[#allocation7 + $0x8] sm:$0xff]
        %v623 = vld [vmem:[#allocation7 + $0x10] sm:$0xff]
        %v624 = vld [vmem:[#allocation7 + $0x18] sm:$0xff]
        %v625 = vld [vmem:[#allocation7 + $0x20] sm:$0xff]
        %v626 = vld [vmem:[#allocation7 + $0x28] sm:$0xff]
        %v627 = vld [vmem:[#allocation7 + $0x30] sm:$0xff]
        %v628 = vld [vmem:[#allocation7 + $0x38] sm:$0xff]
        %v629 = vld [vmem:[#allocation7 + $0x40] sm:$0xff]
        %v630 = vld [vmem:[#allocation7 + $0x48] sm:$0xff]
        %v631 = vld [vmem:[#allocation7 + $0x50] sm:$0xff]
        %v632 = vld [vmem:[#allocation7 + $0x58] sm:$0xff]
        %v633 = vld [vmem:[#allocation7 + $0x60] sm:$0xff]
        %v634 = vld [vmem:[#allocation7 + $0x68] sm:$0xff]
        %v635 = vld [vmem:[#allocation7 + $0x70] sm:$0xff]
        %v636 = vld [vmem:[#allocation7 + $0x78] sm:$0xff]
        %v637 = vld [vmem:[%s4] sm:$0x3]
        %v639 = vperm.slane %v637, 0
        %v640 = vperm.slane %v637, 1
        %v659 = vunpack.c.l.b16 %v621
        %v660 = vunpack.c.h.b16 %v621
        %v661 = vunpack.c.l.b16 %v622
        %v662 = vunpack.c.h.b16 %v622
        %v663 = vunpack.c.l.b16 %v623
        %v664 = vunpack.c.h.b16 %v623
        %v665 = vunpack.c.l.b16 %v624
        %v666 = vunpack.c.h.b16 %v624
        %v667 = vunpack.c.l.b16 %v625
        %v668 = vunpack.c.h.b16 %v625
        %v669 = vunpack.c.l.b16 %v626
        %v670 = vunpack.c.h.b16 %v626
        %v671 = vunpack.c.l.b16 %v627
        %v672 = vunpack.c.h.b16 %v627
        %v673 = vunpack.c.l.b16 %v628
        %v674 = vunpack.c.h.b16 %v628
        %v675 = vunpack.c.l.b16 %v629
        %v676 = vunpack.c.h.b16 %v629
        %v677 = vunpack.c.l.b16 %v630
        %v678 = vunpack.c.h.b16 %v630
        %v679 = vunpack.c.l.b16 %v631
        %v680 = vunpack.c.h.b16 %v631
        %v681 = vunpack.c.l.b16 %v632
        %v682 = vunpack.c.h.b16 %v632
        %v683 = vunpack.c.l.b16 %v633
        %v684 = vunpack.c.h.b16 %v633
        %v685 = vunpack.c.l.b16 %v634
        %v686 = vunpack.c.h.b16 %v634
        %v687 = vunpack.c.l.b16 %v635
        %v688 = vunpack.c.h.b16 %v635
        %v689 = vunpack.c.l.b16 %v636
        %v690 = vunpack.c.h.b16 %v636
        %v691 = vpack.c.b16 %v661, %v659
        %v692 = vpack.c.b16 %v662, %v660
        %v693 = vpack.c.b16 %v665, %v663
        %v694 = vpack.c.b16 %v666, %v664
        %v695 = vpack.c.b16 %v669, %v667
        %v696 = vpack.c.b16 %v670, %v668
        %v697 = vpack.c.b16 %v673, %v671
        %v698 = vpack.c.b16 %v674, %v672
        %v699 = vpack.c.b16 %v677, %v675
        %v700 = vpack.c.b16 %v678, %v676
        %v701 = vpack.c.b16 %v681, %v679
        %v702 = vpack.c.b16 %v682, %v680
        %v703 = vpack.c.b16 %v685, %v683
        %v704 = vpack.c.b16 %v686, %v684
        %v705 = vpack.c.b16 %v689, %v687
        %v706 = vpack.c.b16 %v690, %v688
        %723 = vmatpush.bf16.msra.mxu0 %v705
        %724 = vmatpush.bf16.msra.mxu0 %v703
        %725 = vmatpush.bf16.msra.mxu0 %v701
        %726 = vmatpush.bf16.msra.mxu0 %v699
        %727 = vmatpush.bf16.msra.mxu0 %v697
        %728 = vmatpush.bf16.msra.mxu0 %v695
        %729 = vmatpush.bf16.msra.mxu0 %v693
        %730 = vmatpush.bf16.msra.mxu0 %v691
        %731 = vmatmul.bf16.gmra.mxu0 %v613
        %v732 = vpop.f32.mrf.mxu0
        %v733 = vadd.f32 %v639, %v732
        %v734 = vpop.f32.mrf.mxu0
        %v735 = vadd.f32 %v639, %v734
        %736 = vmatmul.bf16.gmra.mxu0 %v614
        %v737 = vpop.f32.mrf.mxu0
        %v738 = vadd.f32 %v639, %v737
        %v739 = vpop.f32.mrf.mxu0
        %v740 = vadd.f32 %v639, %v739
        %741 = vmatmul.bf16.gmra.mxu0 %v615
        %v742 = vpop.f32.mrf.mxu0
        %v743 = vadd.f32 %v639, %v742
        %v744 = vpop.f32.mrf.mxu0
        %v745 = vadd.f32 %v639, %v744
        %746 = vmatmul.bf16.gmra.mxu0 %v616
        %v747 = vpop.f32.mrf.mxu0
        %v748 = vadd.f32 %v639, %v747
        %v749 = vpop.f32.mrf.mxu0
        %v750 = vadd.f32 %v639, %v749
        %751 = vmatmul.bf16.gmra.mxu0 %v617
        %v752 = vpop.f32.mrf.mxu0
        %v753 = vadd.f32 %v639, %v752
        %v754 = vpop.f32.mrf.mxu0
        %v755 = vadd.f32 %v639, %v754
        %756 = vmatmul.bf16.gmra.mxu0 %v618
        %v757 = vpop.f32.mrf.mxu0
        %v758 = vadd.f32 %v639, %v757
        %v759 = vpop.f32.mrf.mxu0
        %v760 = vadd.f32 %v639, %v759
        %761 = vmatmul.bf16.gmra.mxu0 %v619
        %v762 = vpop.f32.mrf.mxu0
        %v763 = vadd.f32 %v639, %v762
        %v764 = vpop.f32.mrf.mxu0
        %v765 = vadd.f32 %v639, %v764
        %766 = vmatmul.bf16.gmra.mxu0 %v620
        %v767 = vpop.f32.mrf.mxu0
        %v768 = vadd.f32 %v639, %v767
        %v769 = vpop.f32.mrf.mxu0
        %v770 = vadd.f32 %v639, %v769
        %771 = vdwg.mxu0
        %772 = vmatpush.bf16.msra.mxu0 %v706
        %773 = vmatpush.bf16.msra.mxu0 %v704
        %774 = vmatpush.bf16.msra.mxu0 %v702
        %775 = vmatpush.bf16.msra.mxu0 %v700
        %776 = vmatpush.bf16.msra.mxu0 %v698
        %777 = vmatpush.bf16.msra.mxu0 %v696
        %778 = vmatpush.bf16.msra.mxu0 %v694
        %779 = vmatpush.bf16.msra.mxu0 %v692
        %780 = vmatmul.bf16.gmra.mxu0 %v613
        %v781 = vpop.f32.mrf.mxu0
        %v782 = vadd.f32 %v640, %v781
        %v783 = vpop.f32.mrf.mxu0
        %v784 = vadd.f32 %v640, %v783
        %785 = vmatmul.bf16.gmra.mxu0 %v614
        %v786 = vpop.f32.mrf.mxu0
        %v787 = vadd.f32 %v640, %v786
        %v788 = vpop.f32.mrf.mxu0
        %v789 = vadd.f32 %v640, %v788
        %790 = vmatmul.bf16.gmra.mxu0 %v615
        %v791 = vpop.f32.mrf.mxu0
        %v792 = vadd.f32 %v640, %v791
        %v793 = vpop.f32.mrf.mxu0
        %v794 = vadd.f32 %v640, %v793
        %795 = vmatmul.bf16.gmra.mxu0 %v616
        %v796 = vpop.f32.mrf.mxu0
        %v797 = vadd.f32 %v640, %v796
        %v798 = vpop.f32.mrf.mxu0
        %v799 = vadd.f32 %v640, %v798
        %800 = vmatmul.bf16.gmra.mxu0 %v617
        %v801 = vpop.f32.mrf.mxu0
        %v802 = vadd.f32 %v640, %v801
        %v803 = vpop.f32.mrf.mxu0
        %v804 = vadd.f32 %v640, %v803
        %805 = vmatmul.bf16.gmra.mxu0 %v618
        %v806 = vpop.f32.mrf.mxu0
        %v807 = vadd.f32 %v640, %v806
        %v808 = vpop.f32.mrf.mxu0
        %v809 = vadd.f32 %v640, %v808
        %810 = vmatmul.bf16.gmra.mxu0 %v619
        %v811 = vpop.f32.mrf.mxu0
        %v812 = vadd.f32 %v640, %v811
        %v813 = vpop.f32.mrf.mxu0
        %v814 = vadd.f32 %v640, %v813
        %815 = vmatmul.bf16.gmra.mxu0 %v620
        %v816 = vpop.f32.mrf.mxu0
        %v817 = vadd.f32 %v640, %v816
        %v818 = vpop.f32.mrf.mxu0
        %v819 = vadd.f32 %v640, %v818
        %820 = vdwg.mxu0
        %v821 = vsub.f32 %v733, %v319
        %v822 = vsub.f32 %v782, %v320
        %v823 = vsub.f32 %v735, %v321
        %v824 = vsub.f32 %v784, %v322
        %v825 = vsub.f32 %v738, %v323
        %v826 = vsub.f32 %v787, %v324
        %v827 = vsub.f32 %v740, %v325
        %v828 = vsub.f32 %v789, %v326
        %v829 = vsub.f32 %v743, %v327
        %v830 = vsub.f32 %v792, %v328
        %v831 = vsub.f32 %v745, %v329
        %v832 = vsub.f32 %v794, %v330
        %v833 = vsub.f32 %v748, %v331
        %v834 = vsub.f32 %v797, %v332
        %v835 = vsub.f32 %v750, %v333
        %v836 = vsub.f32 %v799, %v334
        %v837 = vsub.f32 %v753, %v335
        %v838 = vsub.f32 %v802, %v336
        %v839 = vsub.f32 %v755, %v337
        %v840 = vsub.f32 %v804, %v338
        %v841 = vsub.f32 %v758, %v339
        %v842 = vsub.f32 %v807, %v340
        %v843 = vsub.f32 %v760, %v341
        %v844 = vsub.f32 %v809, %v342
        %v845 = vsub.f32 %v763, %v343
        %v846 = vsub.f32 %v812, %v344
        %v847 = vsub.f32 %v765, %v345
        %v848 = vsub.f32 %v814, %v346
        %v849 = vsub.f32 %v768, %v347
        %v850 = vsub.f32 %v817, %v348
        %v851 = vsub.f32 %v770, %v349
        %v852 = vsub.f32 %v819, %v350
        %v853 = vlaneseq
        %v854 = vshrl.u32 %v853, 7
        %v855 = vadd.s32 %v854, 8
        %v856 = vadd.s32 %v854, 16
        %v857 = vadd.s32 %v854, 24
        %v858 = vadd.s32 %v854, 32
        %v859 = vadd.s32 %v854, 40
        %v860 = vadd.s32 %v854, 48
        %v861 = vadd.s32 %v854, 56
        %v862 = vadd.s32 %v854, 64
        %v863 = vadd.s32 %v854, 72
        %v864 = vadd.s32 %v854, 80
        %v865 = vadd.s32 %v854, 88
        %v866 = vadd.s32 %v854, 96
        %v867 = vadd.s32 %v854, 104
        %v868 = vadd.s32 %v854, 112
        %v869 = vadd.s32 %v854, 120
        %s870 = smul.u32 %s28, 128
        %v871 = vstv %s870
        %v872 = vadd.s32 %v854, %v871
        %v873 = vadd.s32 %v855, %v871
        %v874 = vadd.s32 %v856, %v871
        %v875 = vadd.s32 %v857, %v871
        %v876 = vadd.s32 %v858, %v871
        %v877 = vadd.s32 %v859, %v871
        %v878 = vadd.s32 %v860, %v871
        %v879 = vadd.s32 %v861, %v871
        %v880 = vadd.s32 %v862, %v871
        %v881 = vadd.s32 %v863, %v871
        %v882 = vadd.s32 %v864, %v871
        %v883 = vadd.s32 %v865, %v871
        %v884 = vadd.s32 %v866, %v871
        %v885 = vadd.s32 %v867, %v871
        %v886 = vadd.s32 %v868, %v871
        %v887 = vadd.s32 %v869, %v871
        %vm888 = vcmp.lt.s32.totalorder %v872, 200
        %vm889 = vcmp.lt.s32.totalorder %v873, 200
        %vm890 = vcmp.lt.s32.totalorder %v874, 200
        %vm891 = vcmp.lt.s32.totalorder %v875, 200
        %vm892 = vcmp.lt.s32.totalorder %v876, 200
        %vm893 = vcmp.lt.s32.totalorder %v877, 200
        %vm894 = vcmp.lt.s32.totalorder %v878, 200
        %vm895 = vcmp.lt.s32.totalorder %v879, 200
        %vm896 = vcmp.lt.s32.totalorder %v880, 200
        %vm897 = vcmp.lt.s32.totalorder %v881, 200
        %vm898 = vcmp.lt.s32.totalorder %v882, 200
        %vm899 = vcmp.lt.s32.totalorder %v883, 200
        %vm900 = vcmp.lt.s32.totalorder %v884, 200
        %vm901 = vcmp.lt.s32.totalorder %v885, 200
        %vm902 = vcmp.lt.s32.totalorder %v886, 200
        %vm903 = vcmp.lt.s32.totalorder %v887, 200
        %v904 = vsel %vm888, 1, 0
        %v905 = vsel %vm889, 1, 0
        %v906 = vsel %vm890, 1, 0
        %v907 = vsel %vm891, 1, 0
        %v908 = vsel %vm892, 1, 0
        %v909 = vsel %vm893, 1, 0
        %v910 = vsel %vm894, 1, 0
        %v911 = vsel %vm895, 1, 0
        %v912 = vsel %vm896, 1, 0
        %v913 = vsel %vm897, 1, 0
        %v914 = vsel %vm898, 1, 0
        %v915 = vsel %vm899, 1, 0
        %v916 = vsel %vm900, 1, 0
        %v917 = vsel %vm901, 1, 0
        %v918 = vsel %vm902, 1, 0
        %v919 = vsel %vm903, 1, 0
        %vm920 = vcmp.eq.s32.totalorder %v904, 1
        %vm921 = vcmp.eq.s32.totalorder %v905, 1
        %vm922 = vcmp.eq.s32.totalorder %v906, 1
        %vm923 = vcmp.eq.s32.totalorder %v907, 1
        %vm924 = vcmp.eq.s32.totalorder %v908, 1
        %vm925 = vcmp.eq.s32.totalorder %v909, 1
        %vm926 = vcmp.eq.s32.totalorder %v910, 1
        %vm927 = vcmp.eq.s32.totalorder %v911, 1
        %vm928 = vcmp.eq.s32.totalorder %v912, 1
        %vm929 = vcmp.eq.s32.totalorder %v913, 1
        %vm930 = vcmp.eq.s32.totalorder %v914, 1
        %vm931 = vcmp.eq.s32.totalorder %v915, 1
        %vm932 = vcmp.eq.s32.totalorder %v916, 1
        %vm933 = vcmp.eq.s32.totalorder %v917, 1
        %vm934 = vcmp.eq.s32.totalorder %v918, 1
        %vm935 = vcmp.eq.s32.totalorder %v919, 1
        %v936 = vsel %vm920, %v821, 0.0
        %v937 = vsel %vm920, %v822, 0.0
        %v938 = vsel %vm921, %v823, 0.0
        %v939 = vsel %vm921, %v824, 0.0
        %v940 = vsel %vm922, %v825, 0.0
        %v941 = vsel %vm922, %v826, 0.0
        %v942 = vsel %vm923, %v827, 0.0
        %v943 = vsel %vm923, %v828, 0.0
        %v944 = vsel %vm924, %v829, 0.0
        %v945 = vsel %vm924, %v830, 0.0
        %v946 = vsel %vm925, %v831, 0.0
        %v947 = vsel %vm925, %v832, 0.0
        %v948 = vsel %vm926, %v833, 0.0
        %v949 = vsel %vm926, %v834, 0.0
        %v950 = vsel %vm927, %v835, 0.0
        %v951 = vsel %vm927, %v836, 0.0
        %v952 = vsel %vm928, %v837, 0.0
        %v953 = vsel %vm928, %v838, 0.0
        %v954 = vsel %vm929, %v839, 0.0
        %v955 = vsel %vm929, %v840, 0.0
        %v956 = vsel %vm930, %v841, 0.0
        %v957 = vsel %vm930, %v842, 0.0
        %v958 = vsel %vm931, %v843, 0.0
        %v959 = vsel %vm931, %v844, 0.0
        %v960 = vsel %vm932, %v845, 0.0
        %v961 = vsel %vm932, %v846, 0.0
        %v962 = vsel %vm933, %v847, 0.0
        %v963 = vsel %vm933, %v848, 0.0
        %v964 = vsel %vm934, %v849, 0.0
        %v965 = vsel %vm934, %v850, 0.0
        %v966 = vsel %vm935, %v851, 0.0
        %v967 = vsel %vm935, %v852, 0.0
        %v968 = vmul.f32 %v936, %v936
        %v969 = vmul.f32 %v937, %v937
        %v970 = vmul.f32 %v938, %v938
        %v971 = vmul.f32 %v939, %v939
        %v972 = vmul.f32 %v940, %v940
        %v973 = vmul.f32 %v941, %v941
        %v974 = vmul.f32 %v942, %v942
        %v975 = vmul.f32 %v943, %v943
        %v976 = vmul.f32 %v944, %v944
        %v977 = vmul.f32 %v945, %v945
        %v978 = vmul.f32 %v946, %v946
        %v979 = vmul.f32 %v947, %v947
        %v980 = vmul.f32 %v948, %v948
        %v981 = vmul.f32 %v949, %v949
        %v982 = vmul.f32 %v950, %v950
        %v983 = vmul.f32 %v951, %v951
        %v984 = vmul.f32 %v952, %v952
        %v985 = vmul.f32 %v953, %v953
        %v986 = vmul.f32 %v954, %v954
        %v987 = vmul.f32 %v955, %v955
        %v988 = vmul.f32 %v956, %v956
        %v989 = vmul.f32 %v957, %v957
        %v990 = vmul.f32 %v958, %v958
        %v991 = vmul.f32 %v959, %v959
        %v992 = vmul.f32 %v960, %v960
        %v993 = vmul.f32 %v961, %v961
        %v994 = vmul.f32 %v962, %v962
        %v995 = vmul.f32 %v963, %v963
        %v996 = vmul.f32 %v964, %v964
        %v997 = vmul.f32 %v965, %v965
        %v998 = vmul.f32 %v966, %v966
        %v999 = vmul.f32 %v967, %v967
        %v1000 = vadd.f32 %v968, %v970
        %v1001 = vadd.f32 %v1000, %v972
        %v1002 = vadd.f32 %v1001, %v974
        %v1003 = vadd.f32 %v1002, %v976
        %v1004 = vadd.f32 %v1003, %v978
        %v1005 = vadd.f32 %v1004, %v980
        %v1006 = vadd.f32 %v1005, %v982
        %v1007 = vadd.f32 %v1006, %v984
        %v1008 = vadd.f32 %v1007, %v986
        %v1009 = vadd.f32 %v1008, %v988
        %v1010 = vadd.f32 %v1009, %v990
        %v1011 = vadd.f32 %v1010, %v992
        %v1012 = vadd.f32 %v1011, %v994
        %v1013 = vadd.f32 %v1012, %v996
        %v1014 = vadd.f32 %v1013, %v998
        %v1015 = vadd.f32 %v969, %v971
        %v1016 = vadd.f32 %v1015, %v973
        %v1017 = vadd.f32 %v1016, %v975
        %v1018 = vadd.f32 %v1017, %v977
        %v1019 = vadd.f32 %v1018, %v979
        %v1020 = vadd.f32 %v1019, %v981
        %v1021 = vadd.f32 %v1020, %v983
        %v1022 = vadd.f32 %v1021, %v985
        %v1023 = vadd.f32 %v1022, %v987
        %v1024 = vadd.f32 %v1023, %v989
        %v1025 = vadd.f32 %v1024, %v991
        %v1026 = vadd.f32 %v1025, %v993
        %v1027 = vadd.f32 %v1026, %v995
        %v1028 = vadd.f32 %v1027, %v997
        %v1029 = vadd.f32 %v1028, %v999
        %1030 = vst [vmem:[%s316] sm:$0xff] %v1014
        %1031 = vst [vmem:[%s316 + $0x8] sm:$0xff] %v1029
        %s1032 = sand.u32 %s146, 1
        %s1033 = scalar_lea.sflag [#allocation4], %s1032
        %s1034 = sand.u32 %s146, 1
        %s1035 = smul.addr %s1034, 128
        %s1036 = scalar_lea.vmem [#allocation8], %s1035
        %s1037 = sand.u32 %s172, 1
        %s1038 = scalar_lea.sflag [#allocation10], %s1037
        %s1039 = sand.u32 %s172, 1
        %s1040 = smul.addr %s1039, 16
        %s1041 = scalar_lea.vmem [#allocation9], %s1040
        // Predicated region
        $region53: #{tpu_custom_call.1} parent=39 // pred_check
          %p1042 = pneg %p156
        $region54: #{tpu_custom_call.1} parent=39 // pred_check_branch
          %1044 = sbr.rel (%p1042) target = $region56
        $region55: #{tpu_custom_call.1} parent=39 // pred_region
          %s1045 = smul.u32 16, %s28
          %1047 = vsyncadd %s1033, 0
          %s1048 = smul.addr %s1045, 8
          %s1049 = scalar_lea.hbm %s5, %s1048
          %s1050 = sshll.u32 %s1036, 4
          %s1051 = int_to_ptr.vmem [resolvable:$true] %s1050
          %s1052 = sshll.u32 %s1049, 4
          %s1053 = int_to_ptr.hbm [resolvable:$true] %s1052
          %1058 = dma.vmem_to_hbm [thread:$0]  %s1051, 2048, %s1053, %s1033, 128, 128, 8
        $region56: #{tpu_custom_call.1} parent=39 // pred_fallthru
          _
        // Predicated region
        $region57: #{tpu_custom_call.1} parent=39 // pred_check
          %p1059 = pneg %p182
        $region58: #{tpu_custom_call.1} parent=39 // pred_check_branch
          %1061 = sbr.rel (%p1059) target = $region60
        $region59: #{tpu_custom_call.1} parent=39 // pred_region
          %1063 = vsyncadd %s1038, 0
          %s1064 = smul.addr %s28, 2
          %s1065 = smul.addr %s1064, 8
          %s1066 = scalar_lea.hbm %s6, %s1065
          %s1068 = sshll.u32 %s1041, 4
          %s1069 = int_to_ptr.vmem [resolvable:$true] %s1068
          %s1070 = sshll.u32 %s1066, 4
          %s1071 = int_to_ptr.hbm [resolvable:$true] %s1070
          %1073 = dma.vmem_to_hbm [thread:$0]  %s1069, 256, %s1071, %s1038
        $region60: #{tpu_custom_call.1} parent=39 // pred_fallthru
          _
      $region40: #{tpu_custom_call.1} parent=5 // pred_fallthru
        _
      %p1074 = scmp.le.s32.totalorder 2, %s23
      // Predicated region
      $region61: #{tpu_custom_call.1} parent=5 // pred_check
        %p1075 = pneg %p1074
      $region62: #{tpu_custom_call.1} parent=5 // pred_check_branch
        %1077 = sbr.rel (%p1075) target = $region64
      $region63: #{tpu_custom_call.1} parent=5 // pred_region
        %s1078 = ssub.s32 %s23, 2
        // Predicated region
        $region65: #{tpu_custom_call.1} parent=63 // pred_check
          %p1079 = pneg %p162
        $region66: #{tpu_custom_call.1} parent=63 // pred_check_branch
          %1081 = sbr.rel (%p1079) target = $region68
        $region67: #{tpu_custom_call.1} parent=63 // pred_region
          %s1082 = sand.u32 %s147, 1
          %s1083 = scalar_lea.sflag [#allocation4], %s1082
          %s1084 = sand.u32 %s147, 1
          %s1085 = smul.addr %s1084, 128
          %s1086 = scalar_lea.vmem [#allocation8], %s1085
          %1088 = dma.done %s1083, 2048
        $region68: #{tpu_custom_call.1} parent=63 // pred_fallthru
          _
        // Predicated region
        $region69: #{tpu_custom_call.1} parent=63 // pred_check
          %p1089 = pneg %p188
        $region70: #{tpu_custom_call.1} parent=63 // pred_check_branch
          %1091 = sbr.rel (%p1089) target = $region72
        $region71: #{tpu_custom_call.1} parent=63 // pred_region
          %s1092 = sand.u32 %s173, 1
          %s1093 = scalar_lea.sflag [#allocation10], %s1092
          %s1094 = sand.u32 %s173, 1
          %s1095 = smul.addr %s1094, 16
          %s1096 = scalar_lea.vmem [#allocation9], %s1095
          %1098 = dma.done %s1093, 256
        $region72: #{tpu_custom_call.1} parent=63 // pred_fallthru
          _
      $region64: #{tpu_custom_call.1} parent=5 // pred_fallthru
        _
    $region6: #{tpu_custom_call.1} parent=1 // loop_footer
      %s27 = sadd.s32 1, %s23
    $region7: #{tpu_custom_call.1} parent=1 // loop_footer_branch
      %22 = sbr.rel target = $region3
    $region8: #{tpu_custom_call.1} parent=1 // loop_exit
      _
    %1099 = vsyncpa [#allocation3], 1
    %s1100 = scalar_lea.sflag [#allocation3], 1
    %1101 = vsyncpa %s1100, 1
    %1102 = vsyncpa [#allocation6], 1
    %1103 = vsyncpa [#allocation4], 1
    %s1104 = scalar_lea.sflag [#allocation4], 1
    %1105 = vsyncpa %s1104, 1
    %1106 = vsyncpa [#allocation10], 1
    %s1107 = scalar_lea.sflag [#allocation10], 1
    %1108 = vsyncpa %s1107, 1

</llo_original>
